<compile_context>
chip_gen: v7x
topology: tpu7x:2x2x1
jax: 0.10.0
libtpu: 0.0.40
codegen_flags: <defaults>
</compile_context>

<pallas_src>
import jax
import jax.numpy as jnp
from jax.experimental import pallas as pl
from jax.experimental.pallas import tpu as pltpu

# Synthetic "dataset" sizes (stand-ins for the pandas nunique() values).
N_DEVICE = 2
N_MEASURE = 8

_HIDDEN = 8
_LANE = 128
_DEFAULT_BLOCK_N = 4096  # f32 lane elements per grid step (16 KiB input block)


def _round_up(x, m):
    return ((x + m - 1) // m) * m


def _ann_kernel(t_ref, w2_ref, aux_ref, o_ref):
    """Whole MLP for one lane-dense batch block.

    t_ref  : (1, Bn)  input row (batch on lanes)
    w2_ref : (8, 8)   Linear(8,8).weight, (out_features, in_features)
    aux_ref: (8, 8)   packed small params:
                      col 0 = Linear(1,8).weight[:, 0]
                      col 1 = Linear(1,8).bias
                      col 2 = Linear(8,8).bias
                      col 3 = Linear(8,1).weight[0, :]
                      [0,4] = Linear(8,1).bias
    o_ref  : (1, Bn)  output row
    """
    t = t_ref[...]                     # (1, Bn) f32
    aux = aux_ref[...]                 # (8, 8)  f32
    w1 = aux[:, 0:1]                   # (8, 1)
    b1 = aux[:, 1:2]                   # (8, 1)
    b2 = aux[:, 2:3]                   # (8, 1)
    w3 = aux[:, 3:4]                   # (8, 1)
    b3 = aux[0:1, 4:5]                 # (1, 1)

    # Layer 1: Linear(1 -> 8) as a broadcast multiply over the lane axis.
    h1 = jnp.tanh(w1 * t + b1)                                     # (8, Bn)

    # Layer 2: Linear(8 -> 8); 8x8 weight stationary, batch streams through.
    h2 = jnp.tanh(
        jnp.dot(w2_ref[...], h1, preferred_element_type=jnp.float32) + b2
    )                                                              # (8, Bn)

    # Layer 3: Linear(8 -> 1) as a sublane reduction -> lane-dense row.
    drift = jnp.sum(h2 * w3, axis=0, keepdims=True) + b3           # (1, Bn)

    o_ref[...] = drift.astype(o_ref.dtype)


def init_params(key):
    """Deterministic params with PyTorch nn.Linear shapes (weight = (out, in))."""
    ks = jax.random.split(key, 6)

    def unif(k, shape, fan_in):
        bound = 1.0 / jnp.sqrt(jnp.float32(fan_in))
        return jax.random.uniform(k, shape, jnp.float32, -bound, bound)

    w1 = unif(ks[0], (8, 1), 1)     # Linear(1, 8).weight
    b1 = unif(ks[1], (8,), 1)       # Linear(1, 8).bias
    w2 = unif(ks[2], (8, 8), 8)     # Linear(8, 8).weight
    b2 = unif(ks[3], (8,), 8)       # Linear(8, 8).bias
    w3 = unif(ks[4], (1, 8), 8)     # Linear(8, 1).weight
    b3 = unif(ks[5], (1,), 8)       # Linear(8, 1).bias
    return w1, b1, w2, b2, w3, b3


def _pack_aux(w1, b1, b2, w3, b3):
    """Pack the five tiny parameter tensors into one (8, 8) VMEM tile."""
    aux = jnp.zeros((_HIDDEN, _HIDDEN), jnp.float32)
    aux = aux.at[:, 0].set(w1[:, 0].astype(jnp.float32))
    aux = aux.at[:, 1].set(b1.astype(jnp.float32))
    aux = aux.at[:, 2].set(b2.astype(jnp.float32))
    aux = aux.at[:, 3].set(w3[0, :].astype(jnp.float32))
    aux = aux.at[0, 4].set(b3[0].astype(jnp.float32))
    return aux


def ann_forward(t, params, *, block_n=_DEFAULT_BLOCK_N):
    """t: (n_device, n_measure) float32 -> (n_device, n_measure) float32."""
    n_device, n_measure = t.shape
    n = n_device * n_measure
    w1, b1, w2, b2, w3, b3 = params

    aux = _pack_aux(w1, b1, b2, w3, b3)
    w2 = w2.astype(jnp.float32)

    # Lane-dense, 128-aligned batch blocks; pad the batch up to a whole grid.
    blk = min(block_n, max(_LANE, _round_up(n, _LANE)))
    n_pad = _round_up(n, blk)

    t_row = t.reshape(1, n).astype(jnp.float32)    # free row-major reshape
    if n_pad != n:
        t_row = jnp.pad(t_row, ((0, 0), (0, n_pad - n)))

    grid = (n_pad // blk,)
    out = pl.pallas_call(
        _ann_kernel,
        out_shape=jax.ShapeDtypeStruct((1, n_pad), jnp.float32),
        grid=grid,
        in_specs=[
            pl.BlockSpec((1, blk), lambda i: (0, i)),              # t blocks
            pl.BlockSpec((_HIDDEN, _HIDDEN), lambda i: (0, 0)),    # w2 resident
            pl.BlockSpec((_HIDDEN, _HIDDEN), lambda i: (0, 0)),    # aux resident
        ],
        out_specs=pl.BlockSpec((1, blk), lambda i: (0, i)),
        compiler_params=pltpu.CompilerParams(
            dimension_semantics=("parallel",),
        ),
    )(t_row, w2, aux)

    return out[0, :n].reshape(n_device, n_measure)


def ann_reference(t, params):
    """Pure-JAX reference of the PyTorch forward, for a correctness check."""
    w1, b1, w2, b2, w3, b3 = params
    x = t.reshape(-1, 1).astype(jnp.float32)
    h1 = jnp.tanh(x @ w1.T + b1)
    h2 = jnp.tanh(h1 @ w2.T + b2)
    y = h2 @ w3.T + b3
    return y.reshape(t.shape)


if __name__ == "__main__":
    key = jax.random.PRNGKey(0)
    k_params, k_t = jax.random.split(key)

    params = init_params(k_params)
    # Input "time steps" per sensor: shape (n_device, n_measure).
    t = jax.random.uniform(k_t, (N_DEVICE, N_MEASURE), jnp.float32, 0.0, 10.0)

    out = ann_forward(t, params)
    jax.block_until_ready(out)

    ref = ann_reference(t, params)
    assert out.shape == (N_DEVICE, N_MEASURE)
    assert jnp.allclose(out, ref, atol=2e-5, rtol=1e-4), "mismatch vs reference"

    print("KERNEL_OK")
</pallas_src>

<mosaic_0001>
module attributes {stable_mosaic.version = 11 : i64} {
  func.func @_ann_kernel(%arg0: i32, %arg1: memref<1x128xf32, #tpu.memory_space<vmem>>, %arg2: memref<8x8xf32, #tpu.memory_space<vmem>>, %arg3: memref<8x8xf32, #tpu.memory_space<vmem>>, %arg4: memref<1x128xf32, #tpu.memory_space<vmem>>) attributes {dimension_semantics = [#tpu.dimension_semantics<parallel>], iteration_bounds = array<i64: 1>, scalar_prefetch = 0 : i64, scratch_operands = 0 : i64, tpu.core_type = #tpu.core_type<tc>, window_params = [{transform_indices = @transform_0, window_bounds = array<i64: 1, 128>}, {pipeline_mode = #tpu.pipeline_mode<synchronous>, transform_indices = @transform_1, window_bounds = array<i64: 8, 8>}, {pipeline_mode = #tpu.pipeline_mode<synchronous>, transform_indices = @transform_2, window_bounds = array<i64: 8, 8>}, {transform_indices = @transform_3, window_bounds = array<i64: 1, 128>}]} {
    %c0 = arith.constant 0 : index
    %c0_0 = arith.constant 0 : index
    %0 = vector.load %arg1[%c0, %c0_0] : memref<1x128xf32, #tpu.memory_space<vmem>>, vector<1x128xf32>
    %c0_1 = arith.constant 0 : index
    %c0_2 = arith.constant 0 : index
    %1 = vector.load %arg3[%c0_1, %c0_2] : memref<8x8xf32, #tpu.memory_space<vmem>>, vector<8x8xf32>
    %2 = vector.extract_strided_slice %1 {offsets = [0, 0], sizes = [8, 1], strides = [1, 1]} : vector<8x8xf32> to vector<8x1xf32>
    %3 = vector.extract_strided_slice %1 {offsets = [0, 1], sizes = [8, 1], strides = [1, 1]} : vector<8x8xf32> to vector<8x1xf32>
    %4 = vector.extract_strided_slice %1 {offsets = [0, 2], sizes = [8, 1], strides = [1, 1]} : vector<8x8xf32> to vector<8x1xf32>
    %5 = vector.extract_strided_slice %1 {offsets = [0, 3], sizes = [8, 1], strides = [1, 1]} : vector<8x8xf32> to vector<8x1xf32>
    %6 = vector.extract_strided_slice %1 {offsets = [0, 4], sizes = [1, 1], strides = [1, 1]} : vector<8x8xf32> to vector<1x1xf32>
    %7 = vector.broadcast %2 : vector<8x1xf32> to vector<8x128xf32>
    %8 = vector.broadcast %0 : vector<1x128xf32> to vector<8x128xf32>
    %9 = arith.mulf %7, %8 : vector<8x128xf32>
    %10 = vector.broadcast %3 : vector<8x1xf32> to vector<8x128xf32>
    %11 = arith.addf %9, %10 : vector<8x128xf32>
    %12 = math.tanh %11 : vector<8x128xf32>
    %c0_3 = arith.constant 0 : index
    %c0_4 = arith.constant 0 : index
    %13 = vector.load %arg2[%c0_3, %c0_4] : memref<8x8xf32, #tpu.memory_space<vmem>>, vector<8x8xf32>
    %cst = arith.constant dense<0.000000e+00> : vector<8x128xf32>
    %14 = tpu.matmul %13, %12, %cst {dimension_numbers = #tpu.dot_dimension_numbers<[1], [0], [0], [1], [0, 0, 1, 1], [], []>} : vector<8x8xf32>, vector<8x128xf32>, vector<8x128xf32> -> vector<8x128xf32>
    %15 = vector.broadcast %4 : vector<8x1xf32> to vector<8x128xf32>
    %16 = arith.addf %14, %15 : vector<8x128xf32>
    %17 = math.tanh %16 : vector<8x128xf32>
    %18 = vector.broadcast %5 : vector<8x1xf32> to vector<8x128xf32>
    %19 = arith.mulf %17, %18 : vector<8x128xf32>
    %cst_5 = arith.constant dense<0.000000e+00> : vector<128xf32>
    %20 = vector.multi_reduction <add>, %19, %cst_5 [0] : vector<8x128xf32> to vector<128xf32>
    %21 = vector.shape_cast %20 : vector<128xf32> to vector<1x128xf32>
    %22 = vector.broadcast %6 : vector<1x1xf32> to vector<1x128xf32>
    %23 = arith.addf %21, %22 : vector<1x128xf32>
    %c0_6 = arith.constant 0 : index
    %c0_7 = arith.constant 0 : index
    %24 = vector.load %arg4[%c0_6, %c0_7] : memref<1x128xf32, #tpu.memory_space<vmem>>, vector<1x128xf32>
    tpu.vector_store %arg4[%c0_6, %c0_7], %23 {strides = array<i32>} : memref<1x128xf32, #tpu.memory_space<vmem>>, vector<1x128xf32>,
    return
  }
  func.func @transform_0(%arg0: i32) -> (i32, i32) {
    %c0_i32 = arith.constant 0 : i32
    %c0_i32_0 = arith.constant 0 : i32
    return %c0_i32, %arg0 : i32, i32
  }
  func.func @transform_1(%arg0: i32) -> (i32, i32) {
    %c0_i32 = arith.constant 0 : i32
    %c0_i32_0 = arith.constant 0 : i32
    %c0_i32_1 = arith.constant 0 : i32
    return %c0_i32, %c0_i32_0 : i32, i32
  }
  func.func @transform_2(%arg0: i32) -> (i32, i32) {
    %c0_i32 = arith.constant 0 : i32
    %c0_i32_0 = arith.constant 0 : i32
    %c0_i32_1 = arith.constant 0 : i32
    return %c0_i32, %c0_i32_0 : i32, i32
  }
  func.func @transform_3(%arg0: i32) -> (i32, i32) {
    %c0_i32 = arith.constant 0 : i32
    %c0_i32_0 = arith.constant 0 : i32
    return %c0_i32, %arg0 : i32, i32
  }
}

</mosaic_0001>

<llo_original>
// kernel: tpu_custom_call.1
$region0: #{tpu_custom_call.1}
  #allocation0 [shape = 'u32[]', space=smem, size = 0x4, offset = 0x4, fixed_abs, tag = 'smem constant byte address 0x4 - core index']
  #allocation1 [shape = 'u32[144,128]{1,0:T(1,128)}', space=vmem, size = 0x12000, scoped, tag = 'internal scratch']
  %s0 = inlined_call_operand.hbm [shape: f32[1,128], index: 0, kind: input, shape index: {}]
  %s1 = inlined_call_operand.hbm [shape: f32[8,8], index: 1, kind: input, shape index: {}]
  %s2 = inlined_call_operand.hbm [shape: f32[8,8], index: 2, kind: input, shape index: {}]
  %s3 = inlined_call_operand.hbm [shape: f32[1,128], index: 3, kind: output, shape index: {}]
  %s4 = sld [smem:[#allocation0]]
  $region34: #{tpu_custom_call.1} parent=0
    _
  %s6 = ssub.s32 1, %s4
  %s7 = scalar_select 0, %s6, %s4
  $region1: #{tpu_custom_call.1} parent=0
    #allocation2 [shape = 'u8[512]{0}', space=vmem, size = 0x400, scoped, tag = 'input window, operand 0, single buffered']
    #allocation3 [shape = 's32[1]{0}', space=sflag, size = 0x4, scoped, tag = 'scoped memory for tpu_custom_call.1']
    #allocation4 [shape = 's32[1]{0}', space=sflag, size = 0x4, scoped, tag = 'scoped memory for tpu_custom_call.1']
    #allocation5 [shape = 'u8[4096]{0}', space=vmem, size = 0x1000, scoped, tag = 'input window, operand 1, single buffered']
    #allocation6 [shape = 's32[1]{0}', space=sflag, size = 0x4, scoped, tag = 'scoped memory for tpu_custom_call.1']
    #allocation7 [shape = 'u8[4096]{0}', space=vmem, size = 0x1000, scoped, tag = 'input window, operand 2, single buffered']
    #allocation8 [shape = 'u8[512]{0}', space=vmem, size = 0x400, scoped, tag = 'output window, operand 0, single buffered']
    %8 = vsyncpa [#allocation3], 0
    %9 = vsyncpa [#allocation6], 0
    %10 = vsyncpa [#allocation4], 0
    // Predicated region
    $region2: #{tpu_custom_call.1} parent=1 // pred_check
      _
    $region3: #{tpu_custom_call.1} parent=1 // pred_check_branch
      %12 = sbr.rel (0) target = $region5
    $region4: #{tpu_custom_call.1} parent=1 // pred_region
      %s14 = ssub.s32 16, 16
      %15 = vsyncadd [#allocation3], %s14
      %s17 = sshll.u32 [#allocation2], 4
      %s18 = int_to_ptr.vmem [resolvable:$true] %s17
      %20 = dma.hbm_to_vmem [thread:$0]  %s0, 16, %s18, [#allocation3]
    $region5: #{tpu_custom_call.1} parent=1 // pred_fallthru
      _
    // Predicated region
    $region6: #{tpu_custom_call.1} parent=1 // pred_check
      _
    $region7: #{tpu_custom_call.1} parent=1 // pred_check_branch
      %22 = sbr.rel (0) target = $region9
    $region8: #{tpu_custom_call.1} parent=1 // pred_region
      %s24 = ssub.s32 128, 128
      %25 = vsyncadd [#allocation6], %s24
      %s27 = sshll.u32 [#allocation5], 4
      %s28 = int_to_ptr.vmem [resolvable:$true] %s27
      %30 = dma.hbm_to_vmem [thread:$0]  %s1, 128, %s28, [#allocation6]
    $region9: #{tpu_custom_call.1} parent=1 // pred_fallthru
      _
    // Predicated region
    $region10: #{tpu_custom_call.1} parent=1 // pred_check
      _
    $region11: #{tpu_custom_call.1} parent=1 // pred_check_branch
      %32 = sbr.rel (0) target = $region13
    $region12: #{tpu_custom_call.1} parent=1 // pred_region
      %s34 = ssub.s32 128, 128
      %35 = vsyncadd [#allocation6], %s34
      %s37 = sshll.u32 [#allocation7], 4
      %s38 = int_to_ptr.vmem [resolvable:$true] %s37
      %40 = dma.hbm_to_vmem [thread:$0]  %s2, 128, %s38, [#allocation6]
    $region13: #{tpu_custom_call.1} parent=1 // pred_fallthru
      _
    // Predicated region
    $region14: #{tpu_custom_call.1} parent=1 // pred_check
      _
    $region15: #{tpu_custom_call.1} parent=1 // pred_check_branch
      %42 = sbr.rel (0) target = $region17
    $region16: #{tpu_custom_call.1} parent=1 // pred_region
      %43 = dma.done [#allocation3], 16
    $region17: #{tpu_custom_call.1} parent=1 // pred_fallthru
      _
    // Predicated region
    $region18: #{tpu_custom_call.1} parent=1 // pred_check
      _
    $region19: #{tpu_custom_call.1} parent=1 // pred_check_branch
      %45 = sbr.rel (0) target = $region21
    $region20: #{tpu_custom_call.1} parent=1 // pred_region
      %46 = dma.done [#allocation6], 128
    $region21: #{tpu_custom_call.1} parent=1 // pred_fallthru
      _
    // Predicated region
    $region22: #{tpu_custom_call.1} parent=1 // pred_check
      _
    $region23: #{tpu_custom_call.1} parent=1 // pred_check_branch
      %48 = sbr.rel (0) target = $region25
    $region24: #{tpu_custom_call.1} parent=1 // pred_region
      %49 = dma.done [#allocation6], 128
    $region25: #{tpu_custom_call.1} parent=1 // pred_fallthru
      _
    %v50 = vld [vmem:[#allocation2] sm:$0x1]
    %v51 = vld [vmem:[#allocation7] sm:$0xff]
    %53 = vset.pattern.permute.xlu0 0
    %54 = vperm.xlu0 %53, %v51
    %v55 = vpop.permute.xlu0 %54
    %v58 = vlaneseq
    %v59 = vshrl.u32 %v58, 7
    %v60 = vsub.s32 0, %v59
    %v61 = vrot.slane %v50, %v60
    %v63 = vmul.f32 %v55, %v61
    %64 = vset.pattern.permute.xlu0 1
    %65 = vperm.xlu0 %64, %v51
    %v66 = vpop.permute.xlu0 %65
    %v68 = vadd.f32 %v63, %v66
    %v69 = vtanh.pop %v68
    %v70 = vld [vmem:[#allocation5] sm:$0xff]
    %71 = vset.pattern.permute.xlu0 2
    %72 = vperm.xlu0 %71, %v51
    %v73 = vpop.permute.xlu0 %72
    %vm75 = vcmask 64512
    %v77 = vsel %vm75, %v70, 0
    %79 = vmatprep.subr.mxu0 0.0
    %80 = vmatpush1.msra.mxu0 %v69
    %81 = vmatprep.subr.mxu0 0.0
    %82 = vmatpush1.msra.mxu0 0.0
    %83 = vmatprep.subr.mxu0 0.0
    %84 = vmatpush1.msra.mxu0 0.0
    %85 = vmatprep.subr.mxu0 0.0
    %86 = vmatpush1.msra.mxu0 0.0
    %87 = vmatprep.subr.mxu0 0.0
    %88 = vmatpush1.msra.mxu0 0.0
    %89 = vmatprep.subr.mxu0 0.0
    %90 = vmatpush1.msra.mxu0 0.0
    %91 = vmatprep.subr.mxu0 0.0
    %92 = vmatpush1.msra.mxu0 0.0
    %93 = vmatprep.subr.mxu0 0.0
    %94 = vmatpush1.msra.mxu0 0.0
    %95 = vmatprep.subr.mxu0 0.0
    %96 = vmatpush1.msra.mxu0 0.0
    %97 = vmatprep.subr.mxu0 0.0
    %98 = vmatpush1.msra.mxu0 0.0
    %99 = vmatprep.subr.mxu0 0.0
    %100 = vmatpush1.msra.mxu0 0.0
    %101 = vmatprep.subr.mxu0 0.0
    %102 = vmatpush1.msra.mxu0 0.0
    %103 = vmatprep.subr.mxu0 0.0
    %104 = vmatpush1.msra.mxu0 0.0
    %105 = vmatprep.subr.mxu0 0.0
    %106 = vmatpush1.msra.mxu0 0.0
    %107 = vmatprep.subr.mxu0 0.0
    %108 = vmatpush1.msra.mxu0 0.0
    %109 = vmatprep.subr.mxu0 0.0
    %110 = vmatpush1.msra.mxu0 0.0
    %111 = vmatprep.subr.mxu0 0.0
    %112 = vmatpush1.msra.mxu0 0.0
    %113 = vmatprep.subr.mxu0 0.0
    %114 = vmatpush1.msra.mxu0 0.0
    %115 = vmatprep.subr.mxu0 0.0
    %116 = vmatpush1.msra.mxu0 0.0
    %117 = vmatprep.subr.mxu0 0.0
    %118 = vmatpush1.msra.mxu0 0.0
    %119 = vmatprep.subr.mxu0 0.0
    %120 = vmatpush1.msra.mxu0 0.0
    %121 = vmatprep.subr.mxu0 0.0
    %122 = vmatpush1.msra.mxu0 0.0
    %123 = vmatprep.subr.mxu0 0.0
    %124 = vmatpush1.msra.mxu0 0.0
    %125 = vmatprep.subr.mxu0 0.0
    %126 = vmatpush1.msra.mxu0 0.0
    %127 = vmatprep.subr.mxu0 0.0
    %128 = vmatpush1.msra.mxu0 0.0
    %129 = vmatprep.subr.mxu0 0.0
    %130 = vmatpush1.msra.mxu0 0.0
    %131 = vmatprep.subr.mxu0 0.0
    %132 = vmatpush1.msra.mxu0 0.0
    %133 = vmatprep.subr.mxu0 0.0
    %134 = vmatpush1.msra.mxu0 0.0
    %135 = vmatprep.subr.mxu0 0.0
    %136 = vmatpush1.msra.mxu0 0.0
    %137 = vmatprep.subr.mxu0 0.0
    %138 = vmatpush1.msra.mxu0 0.0
    %139 = vmatprep.subr.mxu0 0.0
    %140 = vmatpush1.msra.mxu0 0.0
    %141 = vmatprep.subr.mxu0 0.0
    %142 = vmatpush1.msra.mxu0 0.0
    %143 = vmatprep.mubr.f32.mxu0 0.0
    %144 = vmatmul.mubr.f32.gmra.mrb[0].mxu0 %v77
    %v145 = vpop.f32.mrb[0].mxu0
    %v146 = vadd.f32 %v73, %v145
    %v147 = vpop.f32.mrb[0].mxu0
    %148 = vdwg.mxu0
    %v149 = vtanh.pop %v146
    %150 = vset.pattern.permute.xlu0 3
    %151 = vperm.xlu0 %150, %v51
    %v152 = vpop.permute.xlu0 %151
    %v154 = vmul.f32 %v149, %v152
    %v155 = vrot.slane %v154, 4
    %v156 = vadd.f32 %v154, %v155
    %v157 = vrot.slane %v156, 2
    %v158 = vadd.f32 %v156, %v157
    %v159 = vrot.slane %v158, 1
    %v160 = vadd.f32 %v158, %v159
    %161 = vset.pattern.permute.xlu0 4
    %162 = vperm.xlu0 %161, %v51
    %v163 = vpop.permute.xlu0 %162
    %v165 = vadd.f32 %v160, %v163
    %166 = vst [vmem:[#allocation8] sm:$0x1] %v165
    // Predicated region
    $region26: #{tpu_custom_call.1} parent=1 // pred_check
      _
    $region27: #{tpu_custom_call.1} parent=1 // pred_check_branch
      %168 = sbr.rel (0) target = $region29
    $region28: #{tpu_custom_call.1} parent=1 // pred_region
      %s170 = ssub.s32 16, 16
      %171 = vsyncadd [#allocation4], %s170
      %s173 = sshll.u32 [#allocation8], 4
      %s174 = int_to_ptr.vmem [resolvable:$true] %s173
      %176 = dma.vmem_to_hbm [thread:$0]  %s174, 16, %s3, [#allocation4]
    $region29: #{tpu_custom_call.1} parent=1 // pred_fallthru
      _
    // Predicated region
    $region30: #{tpu_custom_call.1} parent=1 // pred_check
      _
    $region31: #{tpu_custom_call.1} parent=1 // pred_check_branch
      %178 = sbr.rel (0) target = $region33
    $region32: #{tpu_custom_call.1} parent=1 // pred_region
      %179 = dma.done [#allocation4], 16
    $region33: #{tpu_custom_call.1} parent=1 // pred_fallthru
      _
    %180 = vsyncpa [#allocation3], 1
    %181 = vsyncpa [#allocation6], 1
    %182 = vsyncpa [#allocation4], 1

</llo_original>
